<compile_context>
chip_gen: v7x
topology: tpu7x:2x2x1
jax: 0.10.0
libtpu: 0.0.40
codegen_flags: <defaults>
</compile_context>

<pallas_src>
import functools
import math

import jax
import jax.numpy as jnp
from jax.experimental import pallas as pl
from jax.experimental.pallas import tpu as pltpu


# ----------------------------------------------------------------------------
# Kernels (shared by the 2-D lane-dense layout and the 3-D layout; jnp
# broadcasting handles the (TS, 1, E) -> (TS, B, E) pos broadcast).
# ----------------------------------------------------------------------------
def pe_add_kernel(tok_ref, pos_ref, out_ref):
    out_ref[...] = (tok_ref[...] + pos_ref[...]).astype(out_ref.dtype)


def pe_add_dropout_kernel(tok_ref, pos_ref, u_ref, out_ref, *, rate, scale):
    # Inverted dropout fused with the positional add.  `u_ref` holds uniform
    # [0,1) numbers generated over the full array in the wrapper, so the mask
    # is tiling-invariant and the kernel lowers on both real TPUs and the
    # interpret backend (no pltpu.prng_* needed).
    x = tok_ref[...] + pos_ref[...]
    keep = u_ref[...] >= rate                       # drop with probability `rate`
    # Fold the 1/(1-rate) scale into the select: one select + one multiply.
    out_ref[...] = (x * jnp.where(keep, scale, 0.0).astype(x.dtype)).astype(
        out_ref.dtype)


# ----------------------------------------------------------------------------
# Buffer construction -- mirrors PositionalEncoding.__init__
# ----------------------------------------------------------------------------
def make_pos_embedding(emb_size: int, maxlen: int = 5000) -> jnp.ndarray:
    den = jnp.exp(-jnp.arange(0, emb_size, 2, dtype=jnp.float32)
                  * math.log(10000.0) / emb_size)                 # (E/2,)
    pos = jnp.arange(0, maxlen, dtype=jnp.float32)[:, None]       # (maxlen, 1)
    angles = pos * den                                            # (maxlen, E/2)
    # interleave: even columns = sin, odd columns = cos
    pe = jnp.stack([jnp.sin(angles), jnp.cos(angles)], axis=-1)   # (maxlen, E/2, 2)
    pe = pe.reshape(maxlen, emb_size)                             # (maxlen, E)
    return pe[:, None, :]                                         # (maxlen, 1, E)


# ----------------------------------------------------------------------------
# Tile selection
# ----------------------------------------------------------------------------
def _seq_tile(seq_len: int, row_bytes: int, target_bytes: int = 2 << 20) -> int:
    """Sequence rows per grid step.

    ~2 MiB per tile amortizes the ~0.35 us per-grid-step overhead and keeps
    double-buffered tok/out(/mask) streams well under the 16 MiB (v5e) /
    32 MiB (v6e, v7x) scoped-VMEM defaults.  The sublane block dim is kept a
    multiple of 8 (or the full extent).  For realistically long sequences the
    grid has >= 2 steps so the axis can shard across v7x's two TensorCores.
    """
    rows = max(1, target_bytes // max(1, row_bytes))
    if rows >= seq_len:
        ts = seq_len
        # Split across the megacore when it is free to do so.
        if seq_len >= 16 and (seq_len // 2) % 8 == 0:
            ts = seq_len // 2
        return ts
    ts = (rows // 8) * 8
    if ts == 0:                       # very wide rows: fall back to 8 rows
        ts = min(8, seq_len)
    return min(ts, seq_len)


# ----------------------------------------------------------------------------
# Wrapper calling pallas_call
# ----------------------------------------------------------------------------
def positional_encoding(token_embedding: jnp.ndarray,
                        pos_embedding: jnp.ndarray,
                        *,
                        dropout_rate: float = 0.1,
                        training: bool = False,
                        rng_key=None) -> jnp.ndarray:
    """dropout(token_embedding + pos_embedding[:S]) for (S, B, E) input."""
    S, B, E = token_embedding.shape
    dtype = token_embedding.dtype
    pos = pos_embedding[:S].astype(dtype)                         # (S, 1, E)

    # ---- layout selection (lane-dense output is the biggest lever) --------
    if E % 128 == 0:
        # E already lane-dense: keep (S, B, E); pos stays (S, 1, E) so pos HBM
        # traffic is only S*E elements and broadcasts over B in-kernel.
        tok = token_embedding
        blk_tok = lambda ts: pl.BlockSpec((ts, B, E), lambda i: (i, 0, 0))
        blk_pos = lambda ts: pl.BlockSpec((ts, 1, E), lambda i: (i, 0, 0))
        pos_in = pos
        out_struct = jax.ShapeDtypeStruct((S, B, E), dtype)
        unflatten = lambda y: y
    else:
        # Small / unaligned E (demo: E=32): flatten to a (S, B*E) slab so the
        # output store lane width is B*E, and pre-tile pos over batch in the
        # wrapper (S*E is tiny, so the extra pos bytes are negligible).
        tok = token_embedding.reshape(S, B * E)
        blk_tok = lambda ts: pl.BlockSpec((ts, B * E), lambda i: (i, 0))
        blk_pos = blk_tok
        pos_in = jnp.tile(pos[:, 0, :], (1, B))                   # (S, B*E)
        out_struct = jax.ShapeDtypeStruct((S, B * E), dtype)
        unflatten = lambda y: y.reshape(S, B, E)

    row_bytes = B * E * tok.dtype.itemsize
    ts = _seq_tile(S, row_bytes)
    grid = (pl.cdiv(S, ts),)
    cparams = pltpu.CompilerParams(
        dimension_semantics=("parallel",),
        vmem_limit_bytes=32 * 1024 * 1024,
    )

    # NOTE: when the caller no longer needs `token_embedding`, passing
    # input_output_aliases={0: 0} lets the add/dropout run in place and saves
    # the extra HBM output allocation; omitted here because the demo reuses
    # the input for the reference check.

    if training and dropout_rate > 0.0:
        if dropout_rate >= 1.0:
            return jnp.zeros_like(token_embedding)
        if rng_key is None:
            rng_key = jax.random.PRNGKey(0)
        # Tiling-invariant dropout mask (same randoms regardless of TS).
        u = jax.random.uniform(rng_key, tok.shape, dtype=jnp.float32)
        kernel = functools.partial(
            pe_add_dropout_kernel,
            rate=float(dropout_rate),
            scale=float(1.0 / (1.0 - dropout_rate)),
        )
        out = pl.pallas_call(
            kernel,
            out_shape=out_struct,
            grid=grid,
            in_specs=[blk_tok(ts), blk_pos(ts), blk_tok(ts)],
            out_specs=blk_tok(ts),
            compiler_params=cparams,
        )(tok, pos_in, u)
        return unflatten(out)

    # Eval mode: dropout is the identity -> fused broadcast add only.
    # (Inside a full model this could just be `x + pos` and left to XLA
    # fusion; the Pallas path is kept so one kernel structure serves both
    # modes and the spec is demonstrated end-to-end.)
    out = pl.pallas_call(
        pe_add_kernel,
        out_shape=out_struct,
        grid=grid,
        in_specs=[blk_tok(ts), blk_pos(ts)],
        out_specs=blk_tok(ts),
        compiler_params=cparams,
    )(tok, pos_in)
    return unflatten(out)


# ----------------------------------------------------------------------------
# Main
# ----------------------------------------------------------------------------
if __name__ == "__main__":
    emb_size = 32
    maxlen = 64
    seq_len = 8
    batch = 2

    key = jax.random.PRNGKey(0)
    k_tok, k_drop = jax.random.split(key)
    token_embedding = jax.random.normal(k_tok, (seq_len, batch, emb_size),
                                        dtype=jnp.float32)
    pos_embedding = make_pos_embedding(emb_size, maxlen)          # (maxlen,1,E)

    # Eval-mode forward (dropout == identity) -- deterministic.
    out = positional_encoding(token_embedding, pos_embedding,
                              dropout_rate=0.1, training=False)
    out = jax.block_until_ready(out)

    ref = token_embedding + pos_embedding[:seq_len]
    assert out.shape == (seq_len, batch, emb_size)
    assert jnp.allclose(out, ref, atol=1e-6, rtol=1e-6)

    # Training path: fused add + inverted dropout (mask from jax.random).
    rate = 0.1
    out_train = positional_encoding(token_embedding, pos_embedding,
                                    dropout_rate=rate, training=True,
                                    rng_key=k_drop)
    out_train = jax.block_until_ready(out_train)
    assert out_train.shape == (seq_len, batch, emb_size)
    # Kept elements equal (x + pos) / (1 - rate); dropped elements are 0.
    scaled_ref = ref / (1.0 - rate)
    kept = jnp.abs(out_train) > 0
    assert jnp.allclose(jnp.where(kept, out_train, scaled_ref), scaled_ref,
                        atol=1e-5, rtol=1e-5)

    print("KERNEL_OK")
</pallas_src>

<mosaic_0001>
module attributes {stable_mosaic.version = 11 : i64} {
  func.func @pe_add_kernel(%arg0: i32, %arg1: memref<8x64xf32, #tpu.memory_space<vmem>>, %arg2: memref<8x64xf32, #tpu.memory_space<vmem>>, %arg3: memref<8x64xf32, #tpu.memory_space<vmem>>) attributes {dimension_semantics = [#tpu.dimension_semantics<parallel>], iteration_bounds = array<i64: 1>, scalar_prefetch = 0 : i64, scratch_operands = 0 : i64, tpu.core_type = #tpu.core_type<tc>, window_params = [{transform_indices = @transform_0, window_bounds = array<i64: 8, 64>}, {transform_indices = @transform_1, window_bounds = array<i64: 8, 64>}, {transform_indices = @transform_2, window_bounds = array<i64: 8, 64>}]} {
    %c0 = arith.constant 0 : index
    %c0_0 = arith.constant 0 : index
    %0 = vector.load %arg1[%c0, %c0_0] : memref<8x64xf32, #tpu.memory_space<vmem>>, vector<8x64xf32>
    %c0_1 = arith.constant 0 : index
    %c0_2 = arith.constant 0 : index
    %1 = vector.load %arg2[%c0_1, %c0_2] : memref<8x64xf32, #tpu.memory_space<vmem>>, vector<8x64xf32>
    %2 = arith.addf %0, %1 : vector<8x64xf32>
    %c0_3 = arith.constant 0 : index
    %c0_4 = arith.constant 0 : index
    %3 = vector.load %arg3[%c0_3, %c0_4] : memref<8x64xf32, #tpu.memory_space<vmem>>, vector<8x64xf32>
    tpu.vector_store %arg3[%c0_3, %c0_4], %2 {strides = array<i32>} : memref<8x64xf32, #tpu.memory_space<vmem>>, vector<8x64xf32>,
    return
  }
  func.func @transform_0(%arg0: i32) -> (i32, i32) {
    %c0_i32 = arith.constant 0 : i32
    %c0_i32_0 = arith.constant 0 : i32
    return %arg0, %c0_i32 : i32, i32
  }
  func.func @transform_1(%arg0: i32) -> (i32, i32) {
    %c0_i32 = arith.constant 0 : i32
    %c0_i32_0 = arith.constant 0 : i32
    return %arg0, %c0_i32 : i32, i32
  }
  func.func @transform_2(%arg0: i32) -> (i32, i32) {
    %c0_i32 = arith.constant 0 : i32
    %c0_i32_0 = arith.constant 0 : i32
    return %arg0, %c0_i32 : i32, i32
  }
}

</mosaic_0001>

<llo_original>
// kernel: tpu_custom_call.1
$region0: #{tpu_custom_call.1}
  #allocation0 [shape = 'u32[]', space=smem, size = 0x4, offset = 0x4, fixed_abs, tag = 'smem constant byte address 0x4 - core index']
  #allocation1 [shape = 'u32[144,128]{1,0:T(1,128)}', space=vmem, size = 0x12000, scoped, tag = 'internal scratch']
  %s0 = inlined_call_operand.hbm [shape: f32[8,64], index: 0, kind: input, shape index: {}]
  %s1 = inlined_call_operand.hbm [shape: f32[8,64], index: 1, kind: input, shape index: {}]
  %s2 = inlined_call_operand.hbm [shape: f32[8,64], index: 2, kind: output, shape index: {}]
  %s3 = sld [smem:[#allocation0]]
  $region26: #{tpu_custom_call.1} parent=0
    _
  %s5 = ssub.s32 1, %s3
  %s6 = scalar_select 0, %s5, %s3
  $region1: #{tpu_custom_call.1} parent=0
    #allocation2 [shape = 'u8[4096]{0}', space=vmem, size = 0x1000, scoped, tag = 'input window, operand 0, single buffered']
    #allocation3 [shape = 's32[1]{0}', space=sflag, size = 0x4, scoped, tag = 'scoped memory for tpu_custom_call.1']
    #allocation4 [shape = 's32[1]{0}', space=sflag, size = 0x4, scoped, tag = 'scoped memory for tpu_custom_call.1']
    #allocation5 [shape = 'u8[4096]{0}', space=vmem, size = 0x1000, scoped, tag = 'input window, operand 1, single buffered']
    #allocation6 [shape = 's32[1]{0}', space=sflag, size = 0x4, scoped, tag = 'scoped memory for tpu_custom_call.1']
    #allocation7 [shape = 'u8[4096]{0}', space=vmem, size = 0x1000, scoped, tag = 'output window, operand 0, single buffered']
    %7 = vsyncpa [#allocation3], 0
    %8 = vsyncpa [#allocation6], 0
    %9 = vsyncpa [#allocation4], 0
    // Predicated region
    $region2: #{tpu_custom_call.1} parent=1 // pred_check
      _
    $region3: #{tpu_custom_call.1} parent=1 // pred_check_branch
      %11 = sbr.rel (0) target = $region5
    $region4: #{tpu_custom_call.1} parent=1 // pred_region
      %s13 = ssub.s32 128, 128
      %14 = vsyncadd [#allocation3], %s13
      %s16 = sshll.u32 [#allocation2], 4
      %s17 = int_to_ptr.vmem [resolvable:$true] %s16
      %19 = dma.hbm_to_vmem [thread:$0]  %s0, 128, %s17, [#allocation3]
    $region5: #{tpu_custom_call.1} parent=1 // pred_fallthru
      _
    // Predicated region
    $region6: #{tpu_custom_call.1} parent=1 // pred_check
      _
    $region7: #{tpu_custom_call.1} parent=1 // pred_check_branch
      %21 = sbr.rel (0) target = $region9
    $region8: #{tpu_custom_call.1} parent=1 // pred_region
      %s23 = ssub.s32 128, 128
      %24 = vsyncadd [#allocation6], %s23
      %s26 = sshll.u32 [#allocation5], 4
      %s27 = int_to_ptr.vmem [resolvable:$true] %s26
      %29 = dma.hbm_to_vmem [thread:$0]  %s1, 128, %s27, [#allocation6]
    $region9: #{tpu_custom_call.1} parent=1 // pred_fallthru
      _
    // Predicated region
    $region10: #{tpu_custom_call.1} parent=1 // pred_check
      _
    $region11: #{tpu_custom_call.1} parent=1 // pred_check_branch
      %31 = sbr.rel (0) target = $region13
    $region12: #{tpu_custom_call.1} parent=1 // pred_region
      %32 = dma.done [#allocation3], 128
    $region13: #{tpu_custom_call.1} parent=1 // pred_fallthru
      _
    // Predicated region
    $region14: #{tpu_custom_call.1} parent=1 // pred_check
      _
    $region15: #{tpu_custom_call.1} parent=1 // pred_check_branch
      %34 = sbr.rel (0) target = $region17
    $region16: #{tpu_custom_call.1} parent=1 // pred_region
      %35 = dma.done [#allocation6], 128
    $region17: #{tpu_custom_call.1} parent=1 // pred_fallthru
      _
    %v36 = vld [vmem:[#allocation2] sm:$0xff]
    %v37 = vld [vmem:[#allocation5] sm:$0xff]
    %v38 = vadd.f32 %v36, %v37
    %vm39 = vcmask 523264
    %40 = vst.msk [vmem:[#allocation7] sm:$0xff] %vm39, %v38
    // Predicated region
    $region18: #{tpu_custom_call.1} parent=1 // pred_check
      _
    $region19: #{tpu_custom_call.1} parent=1 // pred_check_branch
      %42 = sbr.rel (0) target = $region21
    $region20: #{tpu_custom_call.1} parent=1 // pred_region
      %s44 = ssub.s32 128, 128
      %45 = vsyncadd [#allocation4], %s44
      %s47 = sshll.u32 [#allocation7], 4
      %s48 = int_to_ptr.vmem [resolvable:$true] %s47
      %50 = dma.vmem_to_hbm [thread:$0]  %s48, 128, %s2, [#allocation4]
    $region21: #{tpu_custom_call.1} parent=1 // pred_fallthru
      _
    // Predicated region
    $region22: #{tpu_custom_call.1} parent=1 // pred_check
      _
    $region23: #{tpu_custom_call.1} parent=1 // pred_check_branch
      %52 = sbr.rel (0) target = $region25
    $region24: #{tpu_custom_call.1} parent=1 // pred_region
      %53 = dma.done [#allocation4], 128
    $region25: #{tpu_custom_call.1} parent=1 // pred_fallthru
      _
    %54 = vsyncpa [#allocation3], 1
    %55 = vsyncpa [#allocation6], 1
    %56 = vsyncpa [#allocation4], 1

</llo_original>
